<compile_context>
chip_gen: v7x
topology: tpu7x:2x2x1
jax: 0.10.0
libtpu: 0.0.40
codegen_flags: <defaults>
</compile_context>

<pallas_src>
import jax
import jax.numpy as jnp
from jax import lax
from jax.experimental import pallas as pl
from jax.experimental.pallas import tpu as pltpu

# Both the Pallas kernels and the reference must use the same (full) matmul
# precision, otherwise parity checks compare two different bf16-pass roundings.
jax.config.update("jax_default_matmul_precision", "highest")


def _round_up(v, m):
    return ((v + m - 1) // m) * m


# ----------------------------- tiled linear (x @ W + b) -----------------------------

def _linear_kernel(x_ref, w_ref, b_ref, o_ref, acc_ref):
    @pl.when(pl.program_id(2) == 0)
    def _():
        acc_ref[...] = jnp.zeros_like(acc_ref)

    acc_ref[...] += jnp.dot(x_ref[...], w_ref[...],
                            preferred_element_type=jnp.float32)

    @pl.when(pl.program_id(2) == pl.num_programs(2) - 1)
    def _():
        o_ref[...] = (acc_ref[...] + b_ref[...].astype(jnp.float32)).astype(o_ref.dtype)


def linear_pallas(x, w, b, *, tm=256, tn=256, tk=512):
    """x:(M,K) @ w:(K,N) + b:(N,), tiled + pipelined on the MXU."""
    M, K = x.shape
    K2, N = w.shape
    assert K == K2

    # Shrink tiles for small problems (block dims must be 8/128-aligned or full).
    # tk defaults to 512 so typical C collapses the K grid to a single step.
    tm = min(tm, _round_up(M, 8))
    tn = min(tn, _round_up(N, 128))
    tk = min(tk, _round_up(K, 128))
    Mp, Kp, Np = _round_up(M, tm), _round_up(K, tk), _round_up(N, tn)

    xp = jnp.pad(x, ((0, Mp - M), (0, Kp - K))) if (Mp != M or Kp != K) else x
    wp = jnp.pad(w, ((0, Kp - K), (0, Np - N))) if (Kp != K or Np != N) else w
    bp = (jnp.pad(b, ((0, Np - N),)) if Np != N else b).reshape(1, Np)

    cost = pl.CostEstimate(
        flops=2 * M * N * K,
        transcendentals=0,
        bytes_accessed=4 * (Mp * Kp + Kp * Np + Np + Mp * Np),
    )

    out = pl.pallas_call(
        _linear_kernel,
        out_shape=jax.ShapeDtypeStruct((Mp, Np), x.dtype),
        grid_spec=pltpu.PrefetchScalarGridSpec(
            num_scalar_prefetch=0,
            grid=(Mp // tm, Np // tn, Kp // tk),
            in_specs=[
                pl.BlockSpec((tm, tk), lambda i, j, k: (i, k)),
                pl.BlockSpec((tk, tn), lambda i, j, k: (k, j)),
                pl.BlockSpec((1, tn), lambda i, j, k: (0, j)),
            ],
            out_specs=pl.BlockSpec((tm, tn), lambda i, j, k: (i, j)),
            scratch_shapes=[pltpu.VMEM((tm, tn), jnp.float32)],
        ),
        compiler_params=pltpu.CompilerParams(
            dimension_semantics=("parallel", "parallel", "arbitrary"),
            vmem_limit_bytes=32 * 1024 * 1024,
        ),
        cost_estimate=cost,
    )(xp, wp, bp)
    return out[:M, :N]


# ----------------------------- flash-style attention core -----------------------------

def attention_core_pallas(q_arr, k_arr, v_arr, *, C, num_heads, Nq, Nkv,
                          q_col, k_col, v_col, kv_batched, scale,
                          tq, tkv, out_dtype):
    """Scaled-dot-product attention over channel-last inputs.

    q_arr : (B,  Nq_p,  nq_cols*C)  -- q occupies column block `q_col`
    k_arr : (Bkv, Nkv_p, nk_cols*C) -- k occupies column block `k_col`
    v_arr : (Bkv, Nkv_p, nv_cols*C) -- v occupies column block `v_col`
    Output is (B, Nq, C) with heads already merged (lane-dense stores).
    """
    B = q_arr.shape[0]
    Nq_p = q_arr.shape[1]
    Nkv_p = k_arr.shape[1]
    H = num_heads
    d = C // H
    num_q = Nq_p // tq
    num_kv = Nkv_p // tkv
    needs_mask = (Nkv_p != Nkv)  # static: only true when kv rows were padded

    def kernel(q_ref, k_ref, v_ref, o_ref, m_sc, l_sc, acc_sc):
        kv_i = pl.program_id(2)

        @pl.when(kv_i == 0)
        def _():
            m_sc[...] = jnp.full_like(m_sc, -jnp.inf)
            l_sc[...] = jnp.zeros_like(l_sc)
            acc_sc[...] = jnp.zeros_like(acc_sc)

        qb = q_ref[0]   # (tq,  C)  native dtype, channel-last
        kb = k_ref[0]   # (tkv, C)
        vb = v_ref[0]   # (tkv, C)

        if needs_mask:
            kv_pos = kv_i * tkv + lax.broadcasted_iota(jnp.int32, (1, tkv), 1)
            valid = kv_pos < Nkv   # all-true except on the last kv tile

        # Static unrolled loop over heads: per-head 2D MXU dots, small f32
        # score live ranges, lane-dense head slices of the channel-last blocks.
        for h in range(H):
            lo = h * d
            qh = qb[:, lo:lo + d] * scale          # scale the (tq,d) tile, not scores
            kh = kb[:, lo:lo + d]
            # contract on d (no explicit K transpose); f32 accumulation on MXU
            s = lax.dot_general(qh, kh, (((1,), (1,)), ((), ())),
                                preferred_element_type=jnp.float32)  # (tq, tkv)
            if needs_mask:
                s = jnp.where(valid, s, -1e30)
            m_prev = m_sc[h]                                          # (tq, 1)
            m_new = jnp.maximum(m_prev, jnp.max(s, axis=-1, keepdims=True))
            alpha = jnp.exp(m_prev - m_new)
            p = jnp.exp(s - m_new)
            l_sc[h] = alpha * l_sc[h] + jnp.sum(p, axis=-1, keepdims=True)
            acc_sc[h] = alpha * acc_sc[h] + jnp.dot(
                p.astype(vb.dtype), vb[:, lo:lo + d],
                preferred_element_type=jnp.float32)
            m_sc[h] = m_new

        @pl.when(kv_i == num_kv - 1)
        def _():
            # attn_drop rate is 0.0 -> identity; exact divide (no approx recip).
            # Heads are written into their column slice of the lane-dense
            # (1, tq, C) output block; the HBM writeback is one full-width DMA.
            for h in range(H):
                lo = h * d
                o_ref[0, :, lo:lo + d] = (acc_sc[h] / l_sc[h]).astype(o_ref.dtype)

    if kv_batched:
        k_map = lambda b, qi, ki: (b, ki, k_col)
        v_map = lambda b, qi, ki: (b, ki, v_col)
    else:  # shared K/V (cross-attention): reuse batch block 0
        k_map = lambda b, qi, ki: (0, ki, k_col)
        v_map = lambda b, qi, ki: (0, ki, v_col)

    cost = pl.CostEstimate(
        flops=4 * B * H * Nq * Nkv * d,
        transcendentals=B * H * Nq * Nkv,
        bytes_accessed=4 * (B * Nq_p * C + 2 * k_arr.shape[0] * Nkv_p * C
                            + B * Nq_p * C),
    )

    out = pl.pallas_call(
        kernel,
        out_shape=jax.ShapeDtypeStruct((B, Nq_p, C), out_dtype),
        grid_spec=pltpu.PrefetchScalarGridSpec(
            num_scalar_prefetch=0,
            grid=(B, num_q, num_kv),
            in_specs=[
                pl.BlockSpec((1, tq, C), lambda b, qi, ki: (b, qi, q_col)),
                pl.BlockSpec((1, tkv, C), k_map),
                pl.BlockSpec((1, tkv, C), v_map),
            ],
            out_specs=pl.BlockSpec((1, tq, C), lambda b, qi, ki: (b, qi, 0)),
            scratch_shapes=[
                pltpu.VMEM((H, tq, 1), jnp.float32),   # m (running max)
                pltpu.VMEM((H, tq, 1), jnp.float32),   # l (running denom)
                pltpu.VMEM((H, tq, d), jnp.float32),   # acc
            ],
        ),
        compiler_params=pltpu.CompilerParams(
            dimension_semantics=("parallel", "parallel", "arbitrary"),
            vmem_limit_bytes=32 * 1024 * 1024,
        ),
        cost_estimate=cost,
    )(q_arr, k_arr, v_arr)

    if Nq_p != Nq:
        out = out[:, :Nq, :]
    return out


# ----------------------------- module wrapper ------------------------------

def init_attention_params(key, dim, num_heads, dtype=jnp.float32):
    """Deterministic parameter init. Weights stored as (in, out) for x @ W."""
    inner_dim = (dim // num_heads) * num_heads  # == dim here
    ks = jax.random.split(key, 6)
    s = 0.02
    return {
        "wq":  jax.random.normal(ks[0], (dim, inner_dim), dtype) * s,
        "bq":  jax.random.normal(ks[1], (inner_dim,), dtype) * s,
        "wkv": jax.random.normal(ks[2], (dim, 2 * inner_dim), dtype) * s,
        "bkv": jax.random.normal(ks[3], (2 * inner_dim,), dtype) * s,
        "wp":  jax.random.normal(ks[4], (dim, dim), dtype) * s,
        "bp":  jax.random.normal(ks[5], (dim,), dtype) * s,
    }


def attention_forward(params, x, num_heads, attn_kv=None, qk_scale=None,
                      *, tile=128):
    """Pallas implementation of Attention.forward (mask=None, dropout=0)."""
    # TODO(synk): optional additive `mask` input of the PyTorch forward is not wired.
    B, N, C = x.shape
    H = num_heads
    d = C // H
    scale = float(qk_scale) if qk_scale is not None else float(d) ** (-0.5)
    fuse_cols = (C % 128 == 0)   # column-block reads need 128-aligned sections
    tq = min(tile, _round_up(N, 8))

    if attn_kv is None:
        # --- fused Q/KV projection: x read from HBM once, one MXU pass ---
        w_qkv = jnp.concatenate([params["wq"], params["wkv"]], axis=1)   # (C, 3C)
        b_qkv = jnp.concatenate([params["bq"], params["bkv"]], axis=0)   # (3C,)
        qkv = linear_pallas(x.reshape(B * N, C), w_qkv, b_qkv).reshape(B, N, 3 * C)

        Nkv, tkv = N, tq
        Np = _round_up(N, tq)
        if Np != N:
            qkv = jnp.pad(qkv, ((0, 0), (0, Np - N), (0, 0)))
        if fuse_cols:
            # zero-copy: attention reads q/k/v directly out of the fused result
            q_arr = k_arr = v_arr = qkv
            cols = (0, 1, 2)
        else:
            q_arr = qkv[:, :, 0 * C:1 * C]
            k_arr = qkv[:, :, 1 * C:2 * C]
            v_arr = qkv[:, :, 2 * C:3 * C]
            cols = (0, 0, 0)
        o = attention_core_pallas(
            q_arr, k_arr, v_arr, C=C, num_heads=H, Nq=N, Nkv=Nkv,
            q_col=cols[0], k_col=cols[1], v_col=cols[2], kv_batched=True,
            scale=scale, tq=tq, tkv=tkv, out_dtype=x.dtype)
    else:
        # --- cross-attention: shared attn_kv is projected ONCE (no B broadcast) ---
        Nkv = attn_kv.shape[0]
        tkv = min(tile, _round_up(Nkv, 8))
        q = linear_pallas(x.reshape(B * N, C), params["wq"], params["bq"])
        q = q.reshape(B, N, C)
        kv = linear_pallas(attn_kv.reshape(Nkv, C), params["wkv"], params["bkv"])
        kv = kv.reshape(1, Nkv, 2 * C)

        Nq_p = _round_up(N, tq)
        Nkv_p = _round_up(Nkv, tkv)
        if Nq_p != N:
            q = jnp.pad(q, ((0, 0), (0, Nq_p - N), (0, 0)))
        if Nkv_p != Nkv:
            kv = jnp.pad(kv, ((0, 0), (0, Nkv_p - Nkv), (0, 0)))
        if fuse_cols:
            k_arr = v_arr = kv
            cols = (0, 0, 1)
        else:
            k_arr = kv[:, :, :C]
            v_arr = kv[:, :, C:]
            cols = (0, 0, 0)
        o = attention_core_pallas(
            q, k_arr, v_arr, C=C, num_heads=H, Nq=N, Nkv=Nkv,
            q_col=cols[0], k_col=cols[1], v_col=cols[2], kv_batched=False,
            scale=scale, tq=tq, tkv=tkv, out_dtype=x.dtype)

    # --- output projection (o is already (B, N, C): no head-merge transpose) ---
    out = linear_pallas(o.reshape(B * N, C), params["wp"], params["bp"])
    return out.reshape(B, N, C)


# ----------------------------- pure-JAX reference ------------------------------

def attention_reference(params, x, num_heads, attn_kv=None):
    B, N, C = x.shape
    H = num_heads
    d = C // H
    scale = d ** (-0.5)
    if attn_kv is None:
        kv_in = x
    else:
        kv_in = jnp.broadcast_to(attn_kv[None], (B,) + attn_kv.shape)
    N_kv = kv_in.shape[1]
    q = (x @ params["wq"] + params["bq"]).reshape(B, N, H, d).transpose(0, 2, 1, 3)
    kv = (kv_in @ params["wkv"] + params["bkv"]).reshape(B, N_kv, 2, H, d)
    kv = kv.transpose(2, 0, 3, 1, 4)
    k, v = kv[0], kv[1]
    attn = (q * scale) @ jnp.swapaxes(k, -2, -1)
    attn = jax.nn.softmax(attn, axis=-1)
    o = (attn @ v).transpose(0, 2, 1, 3).reshape(B, N, C)
    return o @ params["wp"] + params["bp"]


if __name__ == "__main__":
    key = jax.random.PRNGKey(0)
    k1, k2, k3, k4 = jax.random.split(key, 4)

    RTOL, ATOL = 5e-3, 5e-4

    # 1) toy self-attention (single-tile, C not a multiple of 128 -> split path)
    B, N, C, H = 2, 8, 32, 4
    x = jax.random.normal(k1, (B, N, C), jnp.float32)
    params = init_attention_params(k2, C, H)
    out = jax.block_until_ready(attention_forward(params, x, H))
    ref = attention_reference(params, x, H)
    assert out.shape == (B, N, C)
    assert jnp.allclose(out, ref, rtol=RTOL, atol=ATOL), (
        "self-attn mismatch, max abs err = %e" % float(jnp.max(jnp.abs(out - ref))))

    # 2) toy cross-attention: shared attn_kv, kv-row padding + mask path
    attn_kv = jax.random.normal(k3, (12, C), jnp.float32)
    out_x = jax.block_until_ready(attention_forward(params, x, H, attn_kv=attn_kv))
    ref_x = attention_reference(params, x, H, attn_kv=attn_kv)
    assert jnp.allclose(out_x, ref_x, rtol=RTOL, atol=ATOL), (
        "cross-attn mismatch, max abs err = %e" % float(jnp.max(jnp.abs(out_x - ref_x))))

    # 3) larger self-attention: fused zero-copy column path (C=128),
    #    real tiling/padding and the in-kernel kv mask
    B2, N2, C2, H2 = 2, 200, 128, 4
    x2 = jax.random.normal(k4, (B2, N2, C2), jnp.float32)
    params2 = init_attention_params(jax.random.PRNGKey(1), C2, H2)
    out2 = jax.block_until_ready(attention_forward(params2, x2, H2))
    ref2 = attention_reference(params2, x2, H2)
    assert out2.shape == (B2, N2, C2)
    assert jnp.allclose(out2, ref2, rtol=RTOL, atol=ATOL), (
        "tiled attn mismatch, max abs err = %e" % float(jnp.max(jnp.abs(out2 - ref2))))

    print("KERNEL_OK")
</pallas_src>

<mosaic_0001>
module attributes {stable_mosaic.version = 11 : i64} {
  func.func @_linear_kernel(%arg0: i32, %arg1: i32, %arg2: i32, %arg3: memref<16x128xf32, #tpu.memory_space<vmem>>, %arg4: memref<128x128xf32, #tpu.memory_space<vmem>>, %arg5: memref<1x128xf32, #tpu.memory_space<vmem>>, %arg6: memref<16x128xf32, #tpu.memory_space<vmem>>, %arg7: memref<16x128xf32, #tpu.memory_space<vmem>>) attributes {dimension_semantics = [#tpu.dimension_semantics<parallel>, #tpu.dimension_semantics<parallel>, #tpu.dimension_semantics<arbitrary>], iteration_bounds = array<i64: 1, 1, 1>, scalar_prefetch = 0 : i64, scratch_operands = 1 : i64, tpu.core_type = #tpu.core_type<tc>, window_params = [{transform_indices = @transform_0, window_bounds = array<i64: 16, 128>}, {transform_indices = @transform_1, window_bounds = array<i64: 128, 128>}, {transform_indices = @transform_2, window_bounds = array<i64: 1, 128>}, {transform_indices = @transform_3, window_bounds = array<i64: 16, 128>}]} {
    %c0_i32 = arith.constant 0 : i32
    %0 = arith.cmpi eq, %arg2, %c0_i32 : i32
    %1 = arith.extui %0 : i1 to i32
    %c0_i32_0 = arith.constant 0 : i32
    %2 = arith.cmpi ne, %1, %c0_i32_0 : i32
    scf.if %2 {
      %cst_10 = arith.constant 0.000000e+00 : f32
      %12 = vector.broadcast %cst_10 : f32 to vector<16x128xf32>
      %c0_11 = arith.constant 0 : index
      %c0_12 = arith.constant 0 : index
      %13 = vector.load %arg7[%c0_11, %c0_12] : memref<16x128xf32, #tpu.memory_space<vmem>>, vector<16x128xf32>
      tpu.vector_store %arg7[%c0_11, %c0_12], %12 {strides = array<i32>} : memref<16x128xf32, #tpu.memory_space<vmem>>, vector<16x128xf32>,
    } else {
    }
    %c0 = arith.constant 0 : index
    %c0_1 = arith.constant 0 : index
    %3 = vector.load %arg7[%c0, %c0_1] : memref<16x128xf32, #tpu.memory_space<vmem>>, vector<16x128xf32>
    %c0_2 = arith.constant 0 : index
    %c0_3 = arith.constant 0 : index
    %4 = vector.load %arg3[%c0_2, %c0_3] : memref<16x128xf32, #tpu.memory_space<vmem>>, vector<16x128xf32>
    %c0_4 = arith.constant 0 : index
    %c0_5 = arith.constant 0 : index
    %5 = vector.load %arg4[%c0_4, %c0_5] : memref<128x128xf32, #tpu.memory_space<vmem>>, vector<128x128xf32>
    %cst = arith.constant dense<0.000000e+00> : vector<16x128xf32>
    %6 = tpu.matmul %4, %5, %cst {dimension_numbers = #tpu.dot_dimension_numbers<[1], [0], [0], [1], [0, 0, 1, 1], [], []>, precision = #tpu.contract_precision<fp32>} : vector<16x128xf32>, vector<128x128xf32>, vector<16x128xf32> -> vector<16x128xf32>
    %7 = arith.addf %3, %6 : vector<16x128xf32>
    %c0_6 = arith.constant 0 : index
    %c0_7 = arith.constant 0 : index
    %8 = vector.load %arg7[%c0_6, %c0_7] : memref<16x128xf32, #tpu.memory_space<vmem>>, vector<16x128xf32>
    tpu.vector_store %arg7[%c0_6, %c0_7], %7 {strides = array<i32>} : memref<16x128xf32, #tpu.memory_space<vmem>>, vector<16x128xf32>,
    %c0_i32_8 = arith.constant 0 : i32
    %9 = arith.cmpi eq, %arg2, %c0_i32_8 : i32
    %10 = arith.extui %9 : i1 to i32
    %c0_i32_9 = arith.constant 0 : i32
    %11 = arith.cmpi ne, %10, %c0_i32_9 : i32
    scf.if %11 {
      %c0_10 = arith.constant 0 : index
      %c0_11 = arith.constant 0 : index
      %12 = vector.load %arg7[%c0_10, %c0_11] : memref<16x128xf32, #tpu.memory_space<vmem>>, vector<16x128xf32>
      %c0_12 = arith.constant 0 : index
      %c0_13 = arith.constant 0 : index
      %13 = vector.load %arg5[%c0_12, %c0_13] : memref<1x128xf32, #tpu.memory_space<vmem>>, vector<1x128xf32>
      %14 = vector.broadcast %13 : vector<1x128xf32> to vector<16x128xf32>
      %15 = arith.addf %12, %14 : vector<16x128xf32>
      %c0_14 = arith.constant 0 : index
      %c0_15 = arith.constant 0 : index
      %16 = vector.load %arg6[%c0_14, %c0_15] : memref<16x128xf32, #tpu.memory_space<vmem>>, vector<16x128xf32>
      tpu.vector_store %arg6[%c0_14, %c0_15], %15 {strides = array<i32>} : memref<16x128xf32, #tpu.memory_space<vmem>>, vector<16x128xf32>,
    } else {
    }
    return
  }
  func.func @transform_0(%arg0: i32, %arg1: i32, %arg2: i32) -> (i32, i32) {
    %c0_i32 = arith.constant 0 : i32
    return %arg0, %arg2 : i32, i32
  }
  func.func @transform_1(%arg0: i32, %arg1: i32, %arg2: i32) -> (i32, i32) {
    %c0_i32 = arith.constant 0 : i32
    return %arg2, %arg1 : i32, i32
  }
  func.func @transform_2(%arg0: i32, %arg1: i32, %arg2: i32) -> (i32, i32) {
    %c0_i32 = arith.constant 0 : i32
    %c0_i32_0 = arith.constant 0 : i32
    return %c0_i32, %arg1 : i32, i32
  }
  func.func @transform_3(%arg0: i32, %arg1: i32, %arg2: i32) -> (i32, i32) {
    %c0_i32 = arith.constant 0 : i32
    return %arg0, %arg1 : i32, i32
  }
}

</mosaic_0001>

<llo_original>
// kernel: tpu_custom_call.1
$region0: #{tpu_custom_call.1}
  #allocation0 [shape = 'u32[]', space=smem, size = 0x4, offset = 0x4, fixed_abs, tag = 'smem constant byte address 0x4 - core index']
  #allocation1 [shape = 'u32[144,128]{1,0:T(1,128)}', space=vmem, size = 0x12000, scoped, tag = 'internal scratch']
  #allocation2 [shape = 'f32[16,128]{1,0:T(8,128)}', space=vmem, size = 0x2000, scoped, tag = 'scratch operand']
  %s0 = inlined_call_operand.hbm [shape: f32[16,128], index: 0, kind: input, shape index: {}]
  %s1 = inlined_call_operand.hbm [shape: f32[128,128], index: 1, kind: input, shape index: {}]
  %s2 = inlined_call_operand.vmem [shape: f32[1,128], index: 2, kind: input, shape index: {}]
  %s3 = inlined_call_operand.hbm [shape: f32[16,128], index: 3, kind: output, shape index: {}]
  %s4 = sld [smem:[#allocation0]]
  $region38: #{tpu_custom_call.1} parent=0
    _
  %s6 = ssub.s32 1, %s4
  %s7 = scalar_select 0, %s6, %s4
  $region1: #{tpu_custom_call.1} parent=0
    #allocation3 [shape = 'u8[8192]{0}', space=vmem, size = 0x2000, scoped, tag = 'input window, operand 0, single buffered']
    #allocation4 [shape = 's32[1]{0}', space=sflag, size = 0x4, scoped, tag = 'scoped memory for tpu_custom_call.1']
    #allocation5 [shape = 's32[1]{0}', space=sflag, size = 0x4, scoped, tag = 'scoped memory for tpu_custom_call.1']
    #allocation6 [shape = 'u8[65536]{0}', space=vmem, size = 0x10000, scoped, tag = 'input window, operand 1, single buffered']
    #allocation7 [shape = 's32[1]{0}', space=sflag, size = 0x4, scoped, tag = 'scoped memory for tpu_custom_call.1']
    #allocation8 [shape = 'u8[8192]{0}', space=vmem, size = 0x2000, scoped, tag = 'output window, operand 0, single buffered']
    %8 = vsyncpa [#allocation4], 0
    %9 = vsyncpa [#allocation7], 0
    %10 = vsyncpa [#allocation5], 0
    // Predicated region
    $region2: #{tpu_custom_call.1} parent=1 // pred_check
      _
    $region3: #{tpu_custom_call.1} parent=1 // pred_check_branch
      %12 = sbr.rel (0) target = $region5
    $region4: #{tpu_custom_call.1} parent=1 // pred_region
      %s14 = ssub.s32 256, 256
      %15 = vsyncadd [#allocation4], %s14
      %s16 = sshll.u32 [#allocation3], 4
      %s17 = int_to_ptr.vmem [resolvable:$true] %s16
      %22 = dma.hbm_to_vmem [thread:$0]  %s0, 256, %s17, [#allocation4], 128, 128, 8
    $region5: #{tpu_custom_call.1} parent=1 // pred_fallthru
      _
    // Predicated region
    $region6: #{tpu_custom_call.1} parent=1 // pred_check
      _
    $region7: #{tpu_custom_call.1} parent=1 // pred_check_branch
      %24 = sbr.rel (0) target = $region9
    $region8: #{tpu_custom_call.1} parent=1 // pred_region
      %s26 = ssub.s32 2048, 2048
      %27 = vsyncadd [#allocation7], %s26
      %s28 = sshll.u32 [#allocation6], 4
      %s29 = int_to_ptr.vmem [resolvable:$true] %s28
      %34 = dma.hbm_to_vmem [thread:$0]  %s1, 2048, %s29, [#allocation7], 128, 128, 8
    $region9: #{tpu_custom_call.1} parent=1 // pred_fallthru
      _
    // Predicated region
    $region10: #{tpu_custom_call.1} parent=1 // pred_check
      _
    $region11: #{tpu_custom_call.1} parent=1 // pred_check_branch
      %36 = sbr.rel (0) target = $region13
    $region12: #{tpu_custom_call.1} parent=1 // pred_region
      _
    $region13: #{tpu_custom_call.1} parent=1 // pred_fallthru
      _
    // Predicated region
    $region14: #{tpu_custom_call.1} parent=1 // pred_check
      _
    $region15: #{tpu_custom_call.1} parent=1 // pred_check_branch
      %38 = sbr.rel (0) target = $region17
    $region16: #{tpu_custom_call.1} parent=1 // pred_region
      %39 = dma.done [#allocation4], 256
    $region17: #{tpu_custom_call.1} parent=1 // pred_fallthru
      _
    // Predicated region
    $region18: #{tpu_custom_call.1} parent=1 // pred_check
      _
    $region19: #{tpu_custom_call.1} parent=1 // pred_check_branch
      %41 = sbr.rel (0) target = $region21
    $region20: #{tpu_custom_call.1} parent=1 // pred_region
      %42 = dma.done [#allocation7], 2048
    $region21: #{tpu_custom_call.1} parent=1 // pred_fallthru
      _
    %p43 = scmp.eq.s32.totalorder 0, 0
    // Predicated region
    $region22: #{tpu_custom_call.1} parent=1 // pred_check
      %p44 = pneg %p43
    $region23: #{tpu_custom_call.1} parent=1 // pred_check_branch
      %46 = sbr.rel (%p44) target = $region25
    $region24: #{tpu_custom_call.1} parent=1 // pred_region
      %47 = vst [vmem:[#allocation2] sm:$0xff] 0.0
      %48 = vst [vmem:[#allocation2 + $0x8] sm:$0xff] 0.0
    $region25: #{tpu_custom_call.1} parent=1 // pred_fallthru
      _
    %v49 = vld [vmem:[#allocation2] sm:$0xff]
    %v50 = vld [vmem:[#allocation2 + $0x8] sm:$0xff]
    %v51 = vld [vmem:[#allocation3] sm:$0xff]
    %v52 = vld [vmem:[#allocation3 + $0x8] sm:$0xff]
    %v53 = vld [vmem:[#allocation6] sm:$0xff]
    %v54 = vld [vmem:[#allocation6 + $0x8] sm:$0xff]
    %v55 = vld [vmem:[#allocation6 + $0x10] sm:$0xff]
    %v56 = vld [vmem:[#allocation6 + $0x18] sm:$0xff]
    %v57 = vld [vmem:[#allocation6 + $0x20] sm:$0xff]
    %v58 = vld [vmem:[#allocation6 + $0x28] sm:$0xff]
    %v59 = vld [vmem:[#allocation6 + $0x30] sm:$0xff]
    %v60 = vld [vmem:[#allocation6 + $0x38] sm:$0xff]
    %v61 = vld [vmem:[#allocation6 + $0x40] sm:$0xff]
    %v62 = vld [vmem:[#allocation6 + $0x48] sm:$0xff]
    %v63 = vld [vmem:[#allocation6 + $0x50] sm:$0xff]
    %v64 = vld [vmem:[#allocation6 + $0x58] sm:$0xff]
    %v65 = vld [vmem:[#allocation6 + $0x60] sm:$0xff]
    %v66 = vld [vmem:[#allocation6 + $0x68] sm:$0xff]
    %v67 = vld [vmem:[#allocation6 + $0x70] sm:$0xff]
    %v68 = vld [vmem:[#allocation6 + $0x78] sm:$0xff]
    %69 = vmatprep.subr.mxu0 0.0
    %v70 = vand.u32 %v53, 4294901760
    %71 = vmatpush1.msra.mxu0 %v70
    %72 = vmatprep.subr.mxu0 0.0
    %v73 = vand.u32 %v54, 4294901760
    %74 = vmatpush1.msra.mxu0 %v73
    %75 = vmatprep.subr.mxu0 0.0
    %v76 = vand.u32 %v55, 4294901760
    %77 = vmatpush1.msra.mxu0 %v76
    %78 = vmatprep.subr.mxu0 0.0
    %v79 = vand.u32 %v56, 4294901760
    %80 = vmatpush1.msra.mxu0 %v79
    %81 = vmatprep.subr.mxu0 0.0
    %v82 = vand.u32 %v57, 4294901760
    %83 = vmatpush1.msra.mxu0 %v82
    %84 = vmatprep.subr.mxu0 0.0
    %v85 = vand.u32 %v58, 4294901760
    %86 = vmatpush1.msra.mxu0 %v85
    %87 = vmatprep.subr.mxu0 0.0
    %v88 = vand.u32 %v59, 4294901760
    %89 = vmatpush1.msra.mxu0 %v88
    %90 = vmatprep.subr.mxu0 0.0
    %v91 = vand.u32 %v60, 4294901760
    %92 = vmatpush1.msra.mxu0 %v91
    %93 = vmatprep.subr.mxu0 0.0
    %v94 = vand.u32 %v61, 4294901760
    %95 = vmatpush1.msra.mxu0 %v94
    %96 = vmatprep.subr.mxu0 0.0
    %v97 = vand.u32 %v62, 4294901760
    %98 = vmatpush1.msra.mxu0 %v97
    %99 = vmatprep.subr.mxu0 0.0
    %v100 = vand.u32 %v63, 4294901760
    %101 = vmatpush1.msra.mxu0 %v100
    %102 = vmatprep.subr.mxu0 0.0
    %v103 = vand.u32 %v64, 4294901760
    %104 = vmatpush1.msra.mxu0 %v103
    %105 = vmatprep.subr.mxu0 0.0
    %v106 = vand.u32 %v65, 4294901760
    %107 = vmatpush1.msra.mxu0 %v106
    %108 = vmatprep.subr.mxu0 0.0
    %v109 = vand.u32 %v66, 4294901760
    %110 = vmatpush1.msra.mxu0 %v109
    %111 = vmatprep.subr.mxu0 0.0
    %v112 = vand.u32 %v67, 4294901760
    %113 = vmatpush1.msra.mxu0 %v112
    %114 = vmatprep.subr.mxu0 0.0
    %v115 = vand.u32 %v68, 4294901760
    %116 = vmatpush1.msra.mxu0 %v115
    %117 = vmatprep.subr.mxu0 0.0
    %118 = vmatpush1.msra.mxu0 0.0
    %119 = vmatprep.subr.mxu0 0.0
    %120 = vmatpush1.msra.mxu0 0.0
    %121 = vmatprep.subr.mxu0 0.0
    %122 = vmatpush1.msra.mxu0 0.0
    %123 = vmatprep.subr.mxu0 0.0
    %124 = vmatpush1.msra.mxu0 0.0
    %125 = vmatprep.subr.mxu0 0.0
    %126 = vmatpush1.msra.mxu0 0.0
    %127 = vmatprep.subr.mxu0 0.0
    %128 = vmatpush1.msra.mxu0 0.0
    %129 = vmatprep.subr.mxu0 0.0
    %130 = vmatpush1.msra.mxu0 0.0
    %131 = vmatprep.subr.mxu0 0.0
    %132 = vmatpush1.msra.mxu0 0.0
    %133 = vmatprep.subr.mxu0 0.0
    %134 = vmatpush1.msra.mxu0 0.0
    %135 = vmatprep.subr.mxu0 0.0
    %136 = vmatpush1.msra.mxu0 0.0
    %137 = vmatprep.subr.mxu0 0.0
    %138 = vmatpush1.msra.mxu0 0.0
    %139 = vmatprep.subr.mxu0 0.0
    %140 = vmatpush1.msra.mxu0 0.0
    %141 = vmatprep.subr.mxu0 0.0
    %142 = vmatpush1.msra.mxu0 0.0
    %143 = vmatprep.subr.mxu0 0.0
    %144 = vmatpush1.msra.mxu0 0.0
    %145 = vmatprep.subr.mxu0 0.0
    %146 = vmatpush1.msra.mxu0 0.0
    %147 = vmatprep.subr.mxu0 0.0
    %148 = vmatpush1.msra.mxu0 0.0
    %149 = vmatprep.mubr.f32.mxu0 0.0
    %v150 = vand.u32 %v51, 4294901760
    %v151 = vsub.f32 %v51, %v150
    %v152 = vand.u32 %v151, 4294901760
    %v153 = vsub.f32 %v151, %v152
    %v154 = vand.u32 %v153, 4294901760
    %155 = vmatmul.mubr.f32.gmra.mrb[0].mxu0 %v154
    %v156 = vpop.f32.mrb[0].mxu0
    %v157 = vadd.f32 0.0, %v156
    %v158 = vpop.f32.mrb[0].mxu0
    %159 = vmatprep.mubr.f32.mxu0 0.0
    %v160 = vand.u32 %v52, 4294901760
    %v161 = vsub.f32 %v52, %v160
    %v162 = vand.u32 %v161, 4294901760
    %v163 = vsub.f32 %v161, %v162
    %v164 = vand.u32 %v163, 4294901760
    %165 = vmatmul.mubr.f32.gmra.mrb[0].mxu0 %v164
    %v166 = vpop.f32.mrb[0].mxu0
    %v167 = vadd.f32 0.0, %v166
    %v168 = vpop.f32.mrb[0].mxu0
    %169 = vdwg.mxu0
    %170 = vmatprep.subr.mxu0 0.0
    %v171 = vand.u32 %v53, 4294901760
    %v172 = vsub.f32 %v53, %v171
    %v173 = vand.u32 %v172, 4294901760
    %v174 = vsub.f32 %v172, %v173
    %v175 = vand.u32 %v174, 4294901760
    %176 = vmatpush1.msra.mxu0 %v175
    %177 = vmatprep.subr.mxu0 0.0
    %v178 = vand.u32 %v54, 4294901760
    %v179 = vsub.f32 %v54, %v178
    %v180 = vand.u32 %v179, 4294901760
    %v181 = vsub.f32 %v179, %v180
    %v182 = vand.u32 %v181, 4294901760
    %183 = vmatpush1.msra.mxu0 %v182
    %184 = vmatprep.subr.mxu0 0.0
    %v185 = vand.u32 %v55, 4294901760
    %v186 = vsub.f32 %v55, %v185
    %v187 = vand.u32 %v186, 4294901760
    %v188 = vsub.f32 %v186, %v187
    %v189 = vand.u32 %v188, 4294901760
    %190 = vmatpush1.msra.mxu0 %v189
    %191 = vmatprep.subr.mxu0 0.0
    %v192 = vand.u32 %v56, 4294901760
    %v193 = vsub.f32 %v56, %v192
    %v194 = vand.u32 %v193, 4294901760
    %v195 = vsub.f32 %v193, %v194
    %v196 = vand.u32 %v195, 4294901760
    %197 = vmatpush1.msra.mxu0 %v196
    %198 = vmatprep.subr.mxu0 0.0
    %v199 = vand.u32 %v57, 4294901760
    %v200 = vsub.f32 %v57, %v199
    %v201 = vand.u32 %v200, 4294901760
    %v202 = vsub.f32 %v200, %v201
    %v203 = vand.u32 %v202, 4294901760
    %204 = vmatpush1.msra.mxu0 %v203
    %205 = vmatprep.subr.mxu0 0.0
    %v206 = vand.u32 %v58, 4294901760
    %v207 = vsub.f32 %v58, %v206
    %v208 = vand.u32 %v207, 4294901760
    %v209 = vsub.f32 %v207, %v208
    %v210 = vand.u32 %v209, 4294901760
    %211 = vmatpush1.msra.mxu0 %v210
    %212 = vmatprep.subr.mxu0 0.0
    %v213 = vand.u32 %v59, 4294901760
    %v214 = vsub.f32 %v59, %v213
    %v215 = vand.u32 %v214, 4294901760
    %v216 = vsub.f32 %v214, %v215
    %v217 = vand.u32 %v216, 4294901760
    %218 = vmatpush1.msra.mxu0 %v217
    %219 = vmatprep.subr.mxu0 0.0
    %v220 = vand.u32 %v60, 4294901760
    %v221 = vsub.f32 %v60, %v220
    %v222 = vand.u32 %v221, 4294901760
    %v223 = vsub.f32 %v221, %v222
    %v224 = vand.u32 %v223, 4294901760
    %225 = vmatpush1.msra.mxu0 %v224
    %226 = vmatprep.subr.mxu0 0.0
    %v227 = vand.u32 %v61, 4294901760
    %v228 = vsub.f32 %v61, %v227
    %v229 = vand.u32 %v228, 4294901760
    %v230 = vsub.f32 %v228, %v229
    %v231 = vand.u32 %v230, 4294901760
    %232 = vmatpush1.msra.mxu0 %v231
    %233 = vmatprep.subr.mxu0 0.0
    %v234 = vand.u32 %v62, 4294901760
    %v235 = vsub.f32 %v62, %v234
    %v236 = vand.u32 %v235, 4294901760
    %v237 = vsub.f32 %v235, %v236
    %v238 = vand.u32 %v237, 4294901760
    %239 = vmatpush1.msra.mxu0 %v238
    %240 = vmatprep.subr.mxu0 0.0
    %v241 = vand.u32 %v63, 4294901760
    %v242 = vsub.f32 %v63, %v241
    %v243 = vand.u32 %v242, 4294901760
    %v244 = vsub.f32 %v242, %v243
    %v245 = vand.u32 %v244, 4294901760
    %246 = vmatpush1.msra.mxu0 %v245
    %247 = vmatprep.subr.mxu0 0.0
    %v248 = vand.u32 %v64, 4294901760
    %v249 = vsub.f32 %v64, %v248
    %v250 = vand.u32 %v249, 4294901760
    %v251 = vsub.f32 %v249, %v250
    %v252 = vand.u32 %v251, 4294901760
    %253 = vmatpush1.msra.mxu0 %v252
    %254 = vmatprep.subr.mxu0 0.0
    %v255 = vand.u32 %v65, 4294901760
    %v256 = vsub.f32 %v65, %v255
    %v257 = vand.u32 %v256, 4294901760
    %v258 = vsub.f32 %v256, %v257
    %v259 = vand.u32 %v258, 4294901760
    %260 = vmatpush1.msra.mxu0 %v259
    %261 = vmatprep.subr.mxu0 0.0
    %v262 = vand.u32 %v66, 4294901760
    %v263 = vsub.f32 %v66, %v262
    %v264 = vand.u32 %v263, 4294901760
    %v265 = vsub.f32 %v263, %v264
    %v266 = vand.u32 %v265, 4294901760
    %267 = vmatpush1.msra.mxu0 %v266
    %268 = vmatprep.subr.mxu0 0.0
    %v269 = vand.u32 %v67, 4294901760
    %v270 = vsub.f32 %v67, %v269
    %v271 = vand.u32 %v270, 4294901760
    %v272 = vsub.f32 %v270, %v271
    %v273 = vand.u32 %v272, 4294901760
    %274 = vmatpush1.msra.mxu0 %v273
    %275 = vmatprep.subr.mxu0 0.0
    %v276 = vand.u32 %v68, 4294901760
    %v277 = vsub.f32 %v68, %v276
    %v278 = vand.u32 %v277, 4294901760
    %v279 = vsub.f32 %v277, %v278
    %v280 = vand.u32 %v279, 4294901760
    %281 = vmatpush1.msra.mxu0 %v280
    %282 = vmatprep.subr.mxu0 0.0
    %283 = vmatpush1.msra.mxu0 0.0
    %284 = vmatprep.subr.mxu0 0.0
    %285 = vmatpush1.msra.mxu0 0.0
    %286 = vmatprep.subr.mxu0 0.0
    %287 = vmatpush1.msra.mxu0 0.0
    %288 = vmatprep.subr.mxu0 0.0
    %289 = vmatpush1.msra.mxu0 0.0
    %290 = vmatprep.subr.mxu0 0.0
    %291 = vmatpush1.msra.mxu0 0.0
    %292 = vmatprep.subr.mxu0 0.0
    %293 = vmatpush1.msra.mxu0 0.0
    %294 = vmatprep.subr.mxu0 0.0
    %295 = vmatpush1.msra.mxu0 0.0
    %296 = vmatprep.subr.mxu0 0.0
    %297 = vmatpush1.msra.mxu0 0.0
    %298 = vmatprep.subr.mxu0 0.0
    %299 = vmatpush1.msra.mxu0 0.0
    %300 = vmatprep.subr.mxu0 0.0
    %301 = vmatpush1.msra.mxu0 0.0
    %302 = vmatprep.subr.mxu0 0.0
    %303 = vmatpush1.msra.mxu0 0.0
    %304 = vmatprep.subr.mxu0 0.0
    %305 = vmatpush1.msra.mxu0 0.0
    %306 = vmatprep.subr.mxu0 0.0
    %307 = vmatpush1.msra.mxu0 0.0
    %308 = vmatprep.subr.mxu0 0.0
    %309 = vmatpush1.msra.mxu0 0.0
    %310 = vmatprep.subr.mxu0 0.0
    %311 = vmatpush1.msra.mxu0 0.0
    %312 = vmatprep.subr.mxu0 0.0
    %313 = vmatpush1.msra.mxu0 0.0
    %314 = vmatprep.mubr.f32.mxu0 0.0
    %v315 = vand.u32 %v51, 4294901760
    %316 = vmatmul.mubr.f32.gmra.mrb[0].mxu0 %v315
    %v317 = vpop.f32.mrb[0].mxu0
    %v318 = vadd.f32 %v157, %v317
    %v319 = vpop.f32.mrb[0].mxu0
    %320 = vmatprep.mubr.f32.mxu0 0.0
    %v321 = vand.u32 %v52, 4294901760
    %322 = vmatmul.mubr.f32.gmra.mrb[0].mxu0 %v321
    %v323 = vpop.f32.mrb[0].mxu0
    %v324 = vadd.f32 %v167, %v323
    %v325 = vpop.f32.mrb[0].mxu0
    %326 = vdwg.mxu0
    %327 = vmatprep.subr.mxu0 0.0
    %v328 = vand.u32 %v53, 4294901760
    %v329 = vsub.f32 %v53, %v328
    %330 = vmatpush1.msra.mxu0 %v329
    %331 = vmatprep.subr.mxu0 0.0
    %v332 = vand.u32 %v54, 4294901760
    %v333 = vsub.f32 %v54, %v332
    %334 = vmatpush1.msra.mxu0 %v333
    %335 = vmatprep.subr.mxu0 0.0
    %v336 = vand.u32 %v55, 4294901760
    %v337 = vsub.f32 %v55, %v336
    %338 = vmatpush1.msra.mxu0 %v337
    %339 = vmatprep.subr.mxu0 0.0
    %v340 = vand.u32 %v56, 4294901760
    %v341 = vsub.f32 %v56, %v340
    %342 = vmatpush1.msra.mxu0 %v341
    %343 = vmatprep.subr.mxu0 0.0
    %v344 = vand.u32 %v57, 4294901760
    %v345 = vsub.f32 %v57, %v344
    %346 = vmatpush1.msra.mxu0 %v345
    %347 = vmatprep.subr.mxu0 0.0
    %v348 = vand.u32 %v58, 4294901760
    %v349 = vsub.f32 %v58, %v348
    %350 = vmatpush1.msra.mxu0 %v349
    %351 = vmatprep.subr.mxu0 0.0
    %v352 = vand.u32 %v59, 4294901760
    %v353 = vsub.f32 %v59, %v352
    %354 = vmatpush1.msra.mxu0 %v353
    %355 = vmatprep.subr.mxu0 0.0
    %v356 = vand.u32 %v60, 4294901760
    %v357 = vsub.f32 %v60, %v356
    %358 = vmatpush1.msra.mxu0 %v357
    %359 = vmatprep.subr.mxu0 0.0
    %v360 = vand.u32 %v61, 4294901760
    %v361 = vsub.f32 %v61, %v360
    %362 = vmatpush1.msra.mxu0 %v361
    %363 = vmatprep.subr.mxu0 0.0
    %v364 = vand.u32 %v62, 4294901760
    %v365 = vsub.f32 %v62, %v364
    %366 = vmatpush1.msra.mxu0 %v365
    %367 = vmatprep.subr.mxu0 0.0
    %v368 = vand.u32 %v63, 4294901760
    %v369 = vsub.f32 %v63, %v368
    %370 = vmatpush1.msra.mxu0 %v369
    %371 = vmatprep.subr.mxu0 0.0
    %v372 = vand.u32 %v64, 4294901760
    %v373 = vsub.f32 %v64, %v372
    %374 = vmatpush1.msra.mxu0 %v373
    %375 = vmatprep.subr.mxu0 0.0
    %v376 = vand.u32 %v65, 4294901760
    %v377 = vsub.f32 %v65, %v376
    %378 = vmatpush1.msra.mxu0 %v377
    %379 = vmatprep.subr.mxu0 0.0
    %v380 = vand.u32 %v66, 4294901760
    %v381 = vsub.f32 %v66, %v380
    %382 = vmatpush1.msra.mxu0 %v381
    %383 = vmatprep.subr.mxu0 0.0
    %v384 = vand.u32 %v67, 4294901760
    %v385 = vsub.f32 %v67, %v384
    %386 = vmatpush1.msra.mxu0 %v385
    %387 = vmatprep.subr.mxu0 0.0
    %v388 = vand.u32 %v68, 4294901760
    %v389 = vsub.f32 %v68, %v388
    %390 = vmatpush1.msra.mxu0 %v389
    %391 = vmatprep.subr.mxu0 0.0
    %392 = vmatpush1.msra.mxu0 0.0
    %393 = vmatprep.subr.mxu0 0.0
    %394 = vmatpush1.msra.mxu0 0.0
    %395 = vmatprep.subr.mxu0 0.0
    %396 = vmatpush1.msra.mxu0 0.0
    %397 = vmatprep.subr.mxu0 0.0
    %398 = vmatpush1.msra.mxu0 0.0
    %399 = vmatprep.subr.mxu0 0.0
    %400 = vmatpush1.msra.mxu0 0.0
    %401 = vmatprep.subr.mxu0 0.0
    %402 = vmatpush1.msra.mxu0 0.0
    %403 = vmatprep.subr.mxu0 0.0
    %404 = vmatpush1.msra.mxu0 0.0
    %405 = vmatprep.subr.mxu0 0.0
    %406 = vmatpush1.msra.mxu0 0.0
    %407 = vmatprep.subr.mxu0 0.0
    %408 = vmatpush1.msra.mxu0 0.0
    %409 = vmatprep.subr.mxu0 0.0
    %410 = vmatpush1.msra.mxu0 0.0
    %411 = vmatprep.subr.mxu0 0.0
    %412 = vmatpush1.msra.mxu0 0.0
    %413 = vmatprep.subr.mxu0 0.0
    %414 = vmatpush1.msra.mxu0 0.0
    %415 = vmatprep.subr.mxu0 0.0
    %416 = vmatpush1.msra.mxu0 0.0
    %417 = vmatprep.subr.mxu0 0.0
    %418 = vmatpush1.msra.mxu0 0.0
    %419 = vmatprep.subr.mxu0 0.0
    %420 = vmatpush1.msra.mxu0 0.0
    %421 = vmatprep.subr.mxu0 0.0
    %422 = vmatpush1.msra.mxu0 0.0
    %423 = vmatprep.mubr.f32.mxu0 0.0
    %v424 = vand.u32 %v51, 4294901760
    %v425 = vsub.f32 %v51, %v424
    %426 = vmatmul.mubr.f32.gmra.mrb[0].mxu0 %v425
    %v427 = vpop.f32.mrb[0].mxu0
    %v428 = vadd.f32 %v318, %v427
    %v429 = vpop.f32.mrb[0].mxu0
    %430 = vmatprep.mubr.f32.mxu0 0.0
    %v431 = vand.u32 %v52, 4294901760
    %v432 = vsub.f32 %v52, %v431
    %433 = vmatmul.mubr.f32.gmra.mrb[0].mxu0 %v432
    %v434 = vpop.f32.mrb[0].mxu0
    %v435 = vadd.f32 %v324, %v434
    %v436 = vpop.f32.mrb[0].mxu0
    %437 = vdwg.mxu0
    %438 = vmatprep.subr.mxu0 0.0
    %v439 = vand.u32 %v53, 4294901760
    %440 = vmatpush1.msra.mxu0 %v439
    %441 = vmatprep.subr.mxu0 0.0
    %v442 = vand.u32 %v54, 4294901760
    %443 = vmatpush1.msra.mxu0 %v442
    %444 = vmatprep.subr.mxu0 0.0
    %v445 = vand.u32 %v55, 4294901760
    %446 = vmatpush1.msra.mxu0 %v445
    %447 = vmatprep.subr.mxu0 0.0
    %v448 = vand.u32 %v56, 4294901760
    %449 = vmatpush1.msra.mxu0 %v448
    %450 = vmatprep.subr.mxu0 0.0
    %v451 = vand.u32 %v57, 4294901760
    %452 = vmatpush1.msra.mxu0 %v451
    %453 = vmatprep.subr.mxu0 0.0
    %v454 = vand.u32 %v58, 4294901760
    %455 = vmatpush1.msra.mxu0 %v454
    %456 = vmatprep.subr.mxu0 0.0
    %v457 = vand.u32 %v59, 4294901760
    %458 = vmatpush1.msra.mxu0 %v457
    %459 = vmatprep.subr.mxu0 0.0
    %v460 = vand.u32 %v60, 4294901760
    %461 = vmatpush1.msra.mxu0 %v460
    %462 = vmatprep.subr.mxu0 0.0
    %v463 = vand.u32 %v61, 4294901760
    %464 = vmatpush1.msra.mxu0 %v463
    %465 = vmatprep.subr.mxu0 0.0
    %v466 = vand.u32 %v62, 4294901760
    %467 = vmatpush1.msra.mxu0 %v466
    %468 = vmatprep.subr.mxu0 0.0
    %v469 = vand.u32 %v63, 4294901760
    %470 = vmatpush1.msra.mxu0 %v469
    %471 = vmatprep.subr.mxu0 0.0
    %v472 = vand.u32 %v64, 4294901760
    %473 = vmatpush1.msra.mxu0 %v472
    %474 = vmatprep.subr.mxu0 0.0
    %v475 = vand.u32 %v65, 4294901760
    %476 = vmatpush1.msra.mxu0 %v475
    %477 = vmatprep.subr.mxu0 0.0
    %v478 = vand.u32 %v66, 4294901760
    %479 = vmatpush1.msra.mxu0 %v478
    %480 = vmatprep.subr.mxu0 0.0
    %v481 = vand.u32 %v67, 4294901760
    %482 = vmatpush1.msra.mxu0 %v481
    %483 = vmatprep.subr.mxu0 0.0
    %v484 = vand.u32 %v68, 4294901760
    %485 = vmatpush1.msra.mxu0 %v484
    %486 = vmatprep.subr.mxu0 0.0
    %487 = vmatpush1.msra.mxu0 0.0
    %488 = vmatprep.subr.mxu0 0.0
    %489 = vmatpush1.msra.mxu0 0.0
    %490 = vmatprep.subr.mxu0 0.0
    %491 = vmatpush1.msra.mxu0 0.0
    %492 = vmatprep.subr.mxu0 0.0
    %493 = vmatpush1.msra.mxu0 0.0
    %494 = vmatprep.subr.mxu0 0.0
    %495 = vmatpush1.msra.mxu0 0.0
    %496 = vmatprep.subr.mxu0 0.0
    %497 = vmatpush1.msra.mxu0 0.0
    %498 = vmatprep.subr.mxu0 0.0
    %499 = vmatpush1.msra.mxu0 0.0
    %500 = vmatprep.subr.mxu0 0.0
    %501 = vmatpush1.msra.mxu0 0.0
    %502 = vmatprep.subr.mxu0 0.0
    %503 = vmatpush1.msra.mxu0 0.0
    %504 = vmatprep.subr.mxu0 0.0
    %505 = vmatpush1.msra.mxu0 0.0
    %506 = vmatprep.subr.mxu0 0.0
    %507 = vmatpush1.msra.mxu0 0.0
    %508 = vmatprep.subr.mxu0 0.0
    %509 = vmatpush1.msra.mxu0 0.0
    %510 = vmatprep.subr.mxu0 0.0
    %511 = vmatpush1.msra.mxu0 0.0
    %512 = vmatprep.subr.mxu0 0.0
    %513 = vmatpush1.msra.mxu0 0.0
    %514 = vmatprep.subr.mxu0 0.0
    %515 = vmatpush1.msra.mxu0 0.0
    %516 = vmatprep.subr.mxu0 0.0
    %517 = vmatpush1.msra.mxu0 0.0
    %518 = vmatprep.mubr.f32.mxu0 0.0
    %v519 = vand.u32 %v51, 4294901760
    %v520 = vsub.f32 %v51, %v519
    %v521 = vand.u32 %v520, 4294901760
    %522 = vmatmul.mubr.f32.gmra.mrb[0].mxu0 %v521
    %v523 = vpop.f32.mrb[0].mxu0
    %v524 = vadd.f32 %v428, %v523
    %v525 = vpop.f32.mrb[0].mxu0
    %526 = vmatprep.mubr.f32.mxu0 0.0
    %v527 = vand.u32 %v52, 4294901760
    %v528 = vsub.f32 %v52, %v527
    %v529 = vand.u32 %v528, 4294901760
    %530 = vmatmul.mubr.f32.gmra.mrb[0].mxu0 %v529
    %v531 = vpop.f32.mrb[0].mxu0
    %v532 = vadd.f32 %v435, %v531
    %v533 = vpop.f32.mrb[0].mxu0
    %534 = vdwg.mxu0
    %535 = vmatprep.subr.mxu0 0.0
    %v536 = vand.u32 %v53, 4294901760
    %v537 = vsub.f32 %v53, %v536
    %v538 = vand.u32 %v537, 4294901760
    %539 = vmatpush1.msra.mxu0 %v538
    %540 = vmatprep.subr.mxu0 0.0
    %v541 = vand.u32 %v54, 4294901760
    %v542 = vsub.f32 %v54, %v541
    %v543 = vand.u32 %v542, 4294901760
    %544 = vmatpush1.msra.mxu0 %v543
    %545 = vmatprep.subr.mxu0 0.0
    %v546 = vand.u32 %v55, 4294901760
    %v547 = vsub.f32 %v55, %v546
    %v548 = vand.u32 %v547, 4294901760
    %549 = vmatpush1.msra.mxu0 %v548
    %550 = vmatprep.subr.mxu0 0.0
    %v551 = vand.u32 %v56, 4294901760
    %v552 = vsub.f32 %v56, %v551
    %v553 = vand.u32 %v552, 4294901760
    %554 = vmatpush1.msra.mxu0 %v553
    %555 = vmatprep.subr.mxu0 0.0
    %v556 = vand.u32 %v57, 4294901760
    %v557 = vsub.f32 %v57, %v556
    %v558 = vand.u32 %v557, 4294901760
    %559 = vmatpush1.msra.mxu0 %v558
    %560 = vmatprep.subr.mxu0 0.0
    %v561 = vand.u32 %v58, 4294901760
    %v562 = vsub.f32 %v58, %v561
    %v563 = vand.u32 %v562, 4294901760
    %564 = vmatpush1.msra.mxu0 %v563
    %565 = vmatprep.subr.mxu0 0.0
    %v566 = vand.u32 %v59, 4294901760
    %v567 = vsub.f32 %v59, %v566
    %v568 = vand.u32 %v567, 4294901760
    %569 = vmatpush1.msra.mxu0 %v568
    %570 = vmatprep.subr.mxu0 0.0
    %v571 = vand.u32 %v60, 4294901760
    %v572 = vsub.f32 %v60, %v571
    %v573 = vand.u32 %v572, 4294901760
    %574 = vmatpush1.msra.mxu0 %v573
    %575 = vmatprep.subr.mxu0 0.0
    %v576 = vand.u32 %v61, 4294901760
    %v577 = vsub.f32 %v61, %v576
    %v578 = vand.u32 %v577, 4294901760
    %579 = vmatpush1.msra.mxu0 %v578
    %580 = vmatprep.subr.mxu0 0.0
    %v581 = vand.u32 %v62, 4294901760
    %v582 = vsub.f32 %v62, %v581
    %v583 = vand.u32 %v582, 4294901760
    %584 = vmatpush1.msra.mxu0 %v583
    %585 = vmatprep.subr.mxu0 0.0
    %v586 = vand.u32 %v63, 4294901760
    %v587 = vsub.f32 %v63, %v586
    %v588 = vand.u32 %v587, 4294901760
    %589 = vmatpush1.msra.mxu0 %v588
    %590 = vmatprep.subr.mxu0 0.0
    %v591 = vand.u32 %v64, 4294901760
    %v592 = vsub.f32 %v64, %v591
    %v593 = vand.u32 %v592, 4294901760
    %594 = vmatpush1.msra.mxu0 %v593
    %595 = vmatprep.subr.mxu0 0.0
    %v596 = vand.u32 %v65, 4294901760
    %v597 = vsub.f32 %v65, %v596
    %v598 = vand.u32 %v597, 4294901760
    %599 = vmatpush1.msra.mxu0 %v598
    %600 = vmatprep.subr.mxu0 0.0
    %v601 = vand.u32 %v66, 4294901760
    %v602 = vsub.f32 %v66, %v601
    %v603 = vand.u32 %v602, 4294901760
    %604 = vmatpush1.msra.mxu0 %v603
    %605 = vmatprep.subr.mxu0 0.0
    %v606 = vand.u32 %v67, 4294901760
    %v607 = vsub.f32 %v67, %v606
    %v608 = vand.u32 %v607, 4294901760
    %609 = vmatpush1.msra.mxu0 %v608
    %610 = vmatprep.subr.mxu0 0.0
    %v611 = vand.u32 %v68, 4294901760
    %v612 = vsub.f32 %v68, %v611
    %v613 = vand.u32 %v612, 4294901760
    %614 = vmatpush1.msra.mxu0 %v613
    %615 = vmatprep.subr.mxu0 0.0
    %616 = vmatpush1.msra.mxu0 0.0
    %617 = vmatprep.subr.mxu0 0.0
    %618 = vmatpush1.msra.mxu0 0.0
    %619 = vmatprep.subr.mxu0 0.0
    %620 = vmatpush1.msra.mxu0 0.0
    %621 = vmatprep.subr.mxu0 0.0
    %622 = vmatpush1.msra.mxu0 0.0
    %623 = vmatprep.subr.mxu0 0.0
    %624 = vmatpush1.msra.mxu0 0.0
    %625 = vmatprep.subr.mxu0 0.0
    %626 = vmatpush1.msra.mxu0 0.0
    %627 = vmatprep.subr.mxu0 0.0
    %628 = vmatpush1.msra.mxu0 0.0
    %629 = vmatprep.subr.mxu0 0.0
    %630 = vmatpush1.msra.mxu0 0.0
    %631 = vmatprep.subr.mxu0 0.0
    %632 = vmatpush1.msra.mxu0 0.0
    %633 = vmatprep.subr.mxu0 0.0
    %634 = vmatpush1.msra.mxu0 0.0
    %635 = vmatprep.subr.mxu0 0.0
    %636 = vmatpush1.msra.mxu0 0.0
    %637 = vmatprep.subr.mxu0 0.0
    %638 = vmatpush1.msra.mxu0 0.0
    %639 = vmatprep.subr.mxu0 0.0
    %640 = vmatpush1.msra.mxu0 0.0
    %641 = vmatprep.subr.mxu0 0.0
    %642 = vmatpush1.msra.mxu0 0.0
    %643 = vmatprep.subr.mxu0 0.0
    %644 = vmatpush1.msra.mxu0 0.0
    %645 = vmatprep.subr.mxu0 0.0
    %646 = vmatpush1.msra.mxu0 0.0
    %647 = vmatprep.mubr.f32.mxu0 0.0
    %v648 = vand.u32 %v51, 4294901760
    %649 = vmatmul.mubr.f32.gmra.mrb[0].mxu0 %v648
    %v650 = vpop.f32.mrb[0].mxu0
    %v651 = vadd.f32 %v524, %v650
    %v652 = vpop.f32.mrb[0].mxu0
    %653 = vmatprep.mubr.f32.mxu0 0.0
    %v654 = vand.u32 %v52, 4294901760
    %655 = vmatmul.mubr.f32.gmra.mrb[0].mxu0 %v654
    %v656 = vpop.f32.mrb[0].mxu0
    %v657 = vadd.f32 %v532, %v656
    %v658 = vpop.f32.mrb[0].mxu0
    %659 = vdwg.mxu0
    %660 = vmatprep.subr.mxu0 0.0
    %v661 = vand.u32 %v53, 4294901760
    %662 = vmatpush1.msra.mxu0 %v661
    %663 = vmatprep.subr.mxu0 0.0
    %v664 = vand.u32 %v54, 4294901760
    %665 = vmatpush1.msra.mxu0 %v664
    %666 = vmatprep.subr.mxu0 0.0
    %v667 = vand.u32 %v55, 4294901760
    %668 = vmatpush1.msra.mxu0 %v667
    %669 = vmatprep.subr.mxu0 0.0
    %v670 = vand.u32 %v56, 4294901760
    %671 = vmatpush1.msra.mxu0 %v670
    %672 = vmatprep.subr.mxu0 0.0
    %v673 = vand.u32 %v57, 4294901760
    %674 = vmatpush1.msra.mxu0 %v673
    %675 = vmatprep.subr.mxu0 0.0
    %v676 = vand.u32 %v58, 4294901760
    %677 = vmatpush1.msra.mxu0 %v676
    %678 = vmatprep.subr.mxu0 0.0
    %v679 = vand.u32 %v59, 4294901760
    %680 = vmatpush1.msra.mxu0 %v679
    %681 = vmatprep.subr.mxu0 0.0
    %v682 = vand.u32 %v60, 4294901760
    %683 = vmatpush1.msra.mxu0 %v682
    %684 = vmatprep.subr.mxu0 0.0
    %v685 = vand.u32 %v61, 4294901760
    %686 = vmatpush1.msra.mxu0 %v685
    %687 = vmatprep.subr.mxu0 0.0
    %v688 = vand.u32 %v62, 4294901760
    %689 = vmatpush1.msra.mxu0 %v688
    %690 = vmatprep.subr.mxu0 0.0
    %v691 = vand.u32 %v63, 4294901760
    %692 = vmatpush1.msra.mxu0 %v691
    %693 = vmatprep.subr.mxu0 0.0
    %v694 = vand.u32 %v64, 4294901760
    %695 = vmatpush1.msra.mxu0 %v694
    %696 = vmatprep.subr.mxu0 0.0
    %v697 = vand.u32 %v65, 4294901760
    %698 = vmatpush1.msra.mxu0 %v697
    %699 = vmatprep.subr.mxu0 0.0
    %v700 = vand.u32 %v66, 4294901760
    %701 = vmatpush1.msra.mxu0 %v700
    %702 = vmatprep.subr.mxu0 0.0
    %v703 = vand.u32 %v67, 4294901760
    %704 = vmatpush1.msra.mxu0 %v703
    %705 = vmatprep.subr.mxu0 0.0
    %v706 = vand.u32 %v68, 4294901760
    %707 = vmatpush1.msra.mxu0 %v706
    %708 = vmatprep.subr.mxu0 0.0
    %709 = vmatpush1.msra.mxu0 0.0
    %710 = vmatprep.subr.mxu0 0.0
    %711 = vmatpush1.msra.mxu0 0.0
    %712 = vmatprep.subr.mxu0 0.0
    %713 = vmatpush1.msra.mxu0 0.0
    %714 = vmatprep.subr.mxu0 0.0
    %715 = vmatpush1.msra.mxu0 0.0
    %716 = vmatprep.subr.mxu0 0.0
    %717 = vmatpush1.msra.mxu0 0.0
    %718 = vmatprep.subr.mxu0 0.0
    %719 = vmatpush1.msra.mxu0 0.0
    %720 = vmatprep.subr.mxu0 0.0
    %721 = vmatpush1.msra.mxu0 0.0
    %722 = vmatprep.subr.mxu0 0.0
    %723 = vmatpush1.msra.mxu0 0.0
    %724 = vmatprep.subr.mxu0 0.0
    %725 = vmatpush1.msra.mxu0 0.0
    %726 = vmatprep.subr.mxu0 0.0
    %727 = vmatpush1.msra.mxu0 0.0
    %728 = vmatprep.subr.mxu0 0.0
    %729 = vmatpush1.msra.mxu0 0.0
    %730 = vmatprep.subr.mxu0 0.0
    %731 = vmatpush1.msra.mxu0 0.0
    %732 = vmatprep.subr.mxu0 0.0
    %733 = vmatpush1.msra.mxu0 0.0
    %734 = vmatprep.subr.mxu0 0.0
    %735 = vmatpush1.msra.mxu0 0.0
    %736 = vmatprep.subr.mxu0 0.0
    %737 = vmatpush1.msra.mxu0 0.0
    %738 = vmatprep.subr.mxu0 0.0
    %739 = vmatpush1.msra.mxu0 0.0
    %740 = vmatprep.mubr.f32.mxu0 0.0
    %v741 = vand.u32 %v51, 4294901760
    %742 = vmatmul.mubr.f32.gmra.mrb[0].mxu0 %v741
    %v743 = vpop.f32.mrb[0].mxu0
    %v744 = vadd.f32 %v651, %v743
    %v745 = vpop.f32.mrb[0].mxu0
    %746 = vmatprep.mubr.f32.mxu0 0.0
    %v747 = vand.u32 %v52, 4294901760
    %748 = vmatmul.mubr.f32.gmra.mrb[0].mxu0 %v747
    %v749 = vpop.f32.mrb[0].mxu0
    %v750 = vadd.f32 %v657, %v749
    %v751 = vpop.f32.mrb[0].mxu0
    %752 = vdwg.mxu0
    %v753 = vadd.f32 %v49, %v744
    %v754 = vadd.f32 %v50, %v750
    %755 = vst [vmem:[#allocation2] sm:$0xff] %v753
    %756 = vst [vmem:[#allocation2 + $0x8] sm:$0xff] %v754
    // Predicated region
    $region26: #{tpu_custom_call.1} parent=1 // pred_check
      %p757 = pneg %p43
    $region27: #{tpu_custom_call.1} parent=1 // pred_check_branch
      %759 = sbr.rel (%p757) target = $region29
    $region28: #{tpu_custom_call.1} parent=1 // pred_region
      %v760 = vld [vmem:[#allocation2] sm:$0xff]
      %v761 = vld [vmem:[#allocation2 + $0x8] sm:$0xff]
      %v762 = vld [vmem:[%s2] sm:$0x1]
      %v764 = vlaneseq
      %v765 = vshrl.u32 %v764, 7
      %v766 = vsub.s32 0, %v765
      %v767 = vrot.slane %v762, %v766
      %v769 = vadd.f32 %v760, %v767
      %v770 = vadd.f32 %v761, %v767
      %771 = vst [vmem:[#allocation8] sm:$0xff] %v769
      %772 = vst [vmem:[#allocation8 + $0x8] sm:$0xff] %v770
    $region29: #{tpu_custom_call.1} parent=1 // pred_fallthru
      _
    // Predicated region
    $region30: #{tpu_custom_call.1} parent=1 // pred_check
      _
    $region31: #{tpu_custom_call.1} parent=1 // pred_check_branch
      %774 = sbr.rel (0) target = $region33
    $region32: #{tpu_custom_call.1} parent=1 // pred_region
      %s776 = ssub.s32 256, 256
      %777 = vsyncadd [#allocation5], %s776
      %s778 = sshll.u32 [#allocation8], 4
      %s779 = int_to_ptr.vmem [resolvable:$true] %s778
      %784 = dma.vmem_to_hbm [thread:$0]  %s779, 256, %s3, [#allocation5], 128, 128, 8
    $region33: #{tpu_custom_call.1} parent=1 // pred_fallthru
      _
    // Predicated region
    $region34: #{tpu_custom_call.1} parent=1 // pred_check
      _
    $region35: #{tpu_custom_call.1} parent=1 // pred_check_branch
      %786 = sbr.rel (0) target = $region37
    $region36: #{tpu_custom_call.1} parent=1 // pred_region
      %787 = dma.done [#allocation5], 256
    $region37: #{tpu_custom_call.1} parent=1 // pred_fallthru
      _
    %788 = vsyncpa [#allocation4], 1
    %789 = vsyncpa [#allocation7], 1
    %790 = vsyncpa [#allocation5], 1

</llo_original>
